<compile_context>
chip_gen: v5e
topology: v5e:2x2
jax: 0.10.0
libtpu: 0.0.40
codegen_flags: <defaults>
</compile_context>

<pallas_src>
import functools

import jax
import jax.numpy as jnp
import numpy as np
from jax.experimental import pallas as pl
from jax.experimental.pallas import tpu as pltpu

_LANES = 128
_SUBLANES = 8


# ----------------------------------------------------------------------------
# L1 (generative) loss:  mean(|x - x_encode|)  == torch.nn.L1Loss(reduction='mean')
# ----------------------------------------------------------------------------
def _l1_sum_kernel(a_ref, b_ref, out_ref, acc_ref, *,
                   rows_valid, tile_rows, tiles_per_split, needs_mask):
    i = pl.program_id(1)

    @pl.when(i == 0)
    def _():
        acc_ref[...] = jnp.zeros_like(acc_ref)

    a = a_ref[...].astype(jnp.float32)
    b = b_ref[...].astype(jnp.float32)
    d = jnp.abs(a - b)  # pure VPU filler, hides under the HBM DMA

    if needs_mask:
        # Mask rows that lie beyond the real array extent (partial edge tile or
        # clamped duplicate tiles).  Static python branch -> no cost otherwise.
        tile_id = pl.program_id(0) * tiles_per_split + i
        row0 = tile_id * tile_rows
        r = jax.lax.broadcasted_iota(jnp.int32, d.shape, 0)
        d = jnp.where(row0 + r < rows_valid, d, 0.0)

    acc_ref[...] += d

    @pl.when(i == pl.num_programs(1) - 1)
    def _():
        # one cross-lane/sublane reduction per split, paid once
        out_ref[...] = jnp.broadcast_to(jnp.sum(acc_ref[...]), out_ref.shape)


def l1_loss(x, x_encode, *, target_tile_rows=2048, num_splits=2):
    """mean(|x - x_encode|) over all elements."""
    assert x.shape == x_encode.shape
    n = int(np.prod(x.shape))
    a = x.reshape(-1)
    b = x_encode.reshape(-1)

    if n % _LANES == 0:
        rows = n // _LANES                      # zero-copy lane-dense view
    else:
        # Rare ragged case: zero-pad the flat tail so a (rows, 128) view exists
        # (|0 - 0| = 0 contributes nothing; mean divides by the ORIGINAL n).
        rows = -(-n // _LANES)
        rows = -(-rows // _SUBLANES) * _SUBLANES
        pad = rows * _LANES - n
        a = jnp.pad(a, (0, pad))
        b = jnp.pad(b, (0, pad))
    a = a.reshape(rows, _LANES)
    b = b.reshape(rows, _LANES)

    if rows <= target_tile_rows:
        tile_rows = rows                        # single full-extent block
    else:
        tile_rows = max(_SUBLANES, (target_tile_rows // _SUBLANES) * _SUBLANES)

    num_tiles = -(-rows // tile_rows)
    splits = max(1, min(int(num_splits), num_tiles))
    tiles_per_split = -(-num_tiles // splits)
    needs_clamp = splits * tiles_per_split != num_tiles
    needs_mask = needs_clamp or (rows % tile_rows != 0)

    def in_map(c, i):
        t = c * tiles_per_split + i
        if needs_clamp:
            # duplicate (fully-masked) tiles re-read the last valid tile
            t = jnp.minimum(t, num_tiles - 1)
        return (t, 0)

    # 2 inputs x 2 pipeline buffers + f32 accumulator, plus headroom; capped at
    # 32 MiB (<= scoped default on v6e/v7x, <= physical on v5e).
    block_bytes = tile_rows * _LANES * a.dtype.itemsize
    vmem_limit = int(min(32 << 20,
                         max(8 << 20,
                             4 * block_bytes + tile_rows * _LANES * 4 + (2 << 20))))

    partials = pl.pallas_call(
        functools.partial(_l1_sum_kernel, rows_valid=rows, tile_rows=tile_rows,
                          tiles_per_split=tiles_per_split, needs_mask=needs_mask),
        out_shape=jax.ShapeDtypeStruct((splits, _SUBLANES, _LANES), jnp.float32),
        grid=(splits, tiles_per_split),
        in_specs=[
            pl.BlockSpec((tile_rows, _LANES), in_map),
            pl.BlockSpec((tile_rows, _LANES), in_map),
        ],
        out_specs=pl.BlockSpec((1, _SUBLANES, _LANES), lambda c, i: (c, 0, 0)),
        scratch_shapes=[pltpu.VMEM((tile_rows, _LANES), jnp.float32)],
        compiler_params=pltpu.CompilerParams(
            dimension_semantics=("parallel", "arbitrary"),
            vmem_limit_bytes=vmem_limit,
        ),
    )(a, b)
    return jnp.sum(partials[:, 0, 0]) / n


# ----------------------------------------------------------------------------
# Fused recognition loss (softmax cross-entropy, mean over batch) + KL sparsity
# loss.  Both operate on tiny (B, C) / (B, D) arrays -> single pallas_call to
# avoid paying launch overhead twice.
# TODO(synk): DistCrossEntropy's model-parallel logit all-gather/all-reduce is
# replaced by single-device softmax CE (mathematically identical on one shard).
# ----------------------------------------------------------------------------
def _ce_kl_kernel(logits_ref, labels_ref, latent_ref, out_ref, *, p):
    # --- softmax cross-entropy, mean over batch -----------------------------
    logits = logits_ref[...].astype(jnp.float32)  # (B, C)
    bsz, nclass = logits.shape
    m = jnp.max(logits, axis=-1, keepdims=True)
    lse = jnp.log(jnp.sum(jnp.exp(logits - m), axis=-1, keepdims=True)) + m
    col = jax.lax.broadcasted_iota(jnp.int32, (bsz, nclass), 1)
    picked = jnp.sum(jnp.where(col == labels_ref[...], logits, 0.0),
                     axis=-1, keepdims=True)  # masked select, no one-hot matmul
    out_ref[0, 0] = jnp.mean(lse - picked)

    # --- KL sparsity loss (matches reference: clip AFTER the normalization) --
    x = latent_ref[...].astype(jnp.float32)  # (B, D)
    xm = jnp.mean(x, axis=0, keepdims=True)
    q = xm / jnp.sum(xm)
    q = jnp.clip(q, 1e-8, 1.0 - 1e-8)
    s1 = jnp.sum(p * jnp.log(p / q))
    s2 = jnp.sum((1.0 - p) * jnp.log((1.0 - p) / (1.0 - q)))
    out_ref[0, 1] = s1 + s2


def ce_and_kl_loss(logits, labels, x_latent, *, sparsity_target=0.01):
    labels2d = labels.astype(jnp.int32).reshape(-1, 1)
    out = pl.pallas_call(
        functools.partial(_ce_kl_kernel, p=float(sparsity_target)),
        out_shape=jax.ShapeDtypeStruct((1, 2), jnp.float32),
        in_specs=[
            pl.BlockSpec(memory_space=pltpu.MemorySpace.VMEM),
            pl.BlockSpec(memory_space=pltpu.MemorySpace.VMEM),
            pl.BlockSpec(memory_space=pltpu.MemorySpace.VMEM),
        ],
        out_specs=pl.BlockSpec(memory_space=pltpu.MemorySpace.SMEM),
    )(logits, labels2d, x_latent)
    return out[0, 0], out[0, 1]


# ----------------------------------------------------------------------------
# MinusLoss forward
# ----------------------------------------------------------------------------
def minus_loss(x, x_encode, x_latent, outputs, labels, mode="stage1", weights=None):
    w = {"gen": 5.0, "fr": 1.0, "spar": 0.0} if weights is None else dict(weights)

    if mode == "toy":
        loss_gen = l1_loss(x, x_encode) * w["gen"]
        ce, _ = ce_and_kl_loss(outputs, labels, x_latent)
        loss_fr = ce * w["fr"]
        return loss_gen + loss_fr, loss_gen, loss_fr

    if mode == "stage2":
        w["gen"] = w["spar"] = 0.0
    loss_gen = l1_loss(x, x_encode) * w["gen"]
    ce, kl = ce_and_kl_loss(outputs, labels, x_latent, sparsity_target=0.01)
    loss_fr = ce * w["fr"]
    loss_ls = kl * w["spar"]
    loss = loss_gen + loss_fr + loss_ls
    return loss, loss_gen, loss_fr, loss_ls


# ----------------------------------------------------------------------------
# Pure-JAX reference (mirrors the PyTorch math) for correctness checks.
# ----------------------------------------------------------------------------
def _ref_minus_loss(x, x_encode, x_latent, outputs, labels, weights):
    loss_gen = jnp.mean(jnp.abs(x - x_encode)) * weights["gen"]
    logits = outputs.astype(jnp.float32)
    logz = jax.scipy.special.logsumexp(logits, axis=-1)
    picked = jnp.take_along_axis(logits, labels[:, None], axis=-1)[:, 0]
    loss_fr = jnp.mean(logz - picked) * weights["fr"]
    xm = jnp.mean(x_latent, axis=0, keepdims=True)
    q = xm / jnp.sum(xm)
    q = jnp.clip(q, 1e-8, 1 - 1e-8)
    p = 0.01
    kl = jnp.sum(p * jnp.log(p / q)) + jnp.sum((1 - p) * jnp.log((1 - p) / (1 - q)))
    loss_ls = kl * weights["spar"]
    return loss_gen + loss_fr + loss_ls, loss_gen, loss_fr, loss_ls


if __name__ == "__main__":
    key = jax.random.PRNGKey(0)
    k1, k2, k3, k4, k5, k6, k7, k8, k9 = jax.random.split(key, 9)

    B, C, H, W = 2, 4, 16, 16  # images (NCHW)
    D = 32                     # latent dim
    NUM_CLASSES = 16

    x = jax.random.normal(k1, (B, C, H, W), dtype=jnp.float32)
    x_encode = jax.random.normal(k2, (B, C, H, W), dtype=jnp.float32)
    x_latent = jax.random.uniform(k3, (B, D), dtype=jnp.float32, minval=0.01, maxval=1.0)
    outputs = jax.random.normal(k4, (B, NUM_CLASSES), dtype=jnp.float32)
    labels = jax.random.randint(k5, (B,), 0, NUM_CLASSES, dtype=jnp.int32)

    # stage1
    loss, loss_gen, loss_fr, loss_ls = minus_loss(
        x, x_encode, x_latent, outputs, labels, mode="stage1"
    )
    jax.block_until_ready((loss, loss_gen, loss_fr, loss_ls))

    ref = _ref_minus_loss(
        x, x_encode, x_latent, outputs, labels,
        {"gen": 5.0, "fr": 1.0, "spar": 0.0},
    )
    np.testing.assert_allclose(np.array(loss), np.array(ref[0]), rtol=1e-5, atol=1e-5)
    np.testing.assert_allclose(np.array(loss_gen), np.array(ref[1]), rtol=1e-5, atol=1e-5)
    np.testing.assert_allclose(np.array(loss_fr), np.array(ref[2]), rtol=1e-5, atol=1e-5)
    np.testing.assert_allclose(np.array(loss_ls), np.array(ref[3]), rtol=1e-5, atol=1e-5)

    # stage2 (gen / spar weights zeroed)
    loss2 = minus_loss(x, x_encode, x_latent, outputs, labels, mode="stage2")[0]
    jax.block_until_ready(loss2)
    np.testing.assert_allclose(np.array(loss2), np.array(ref[2]), rtol=1e-5, atol=1e-5)

    # toy mode
    lt, lg, lf = minus_loss(x, x_encode, x_latent, outputs, labels, mode="toy")
    jax.block_until_ready(lt)
    np.testing.assert_allclose(np.array(lt), np.array(ref[1] + ref[2]), rtol=1e-5, atol=1e-5)

    # ragged / non-128-divisible L1 shape exercises the zero-padding fallback
    xr = jax.random.normal(k6, (2, 3, 7, 9), dtype=jnp.float32)
    yr = jax.random.normal(k7, (2, 3, 7, 9), dtype=jnp.float32)
    l1_ragged = l1_loss(xr, yr)
    jax.block_until_ready(l1_ragged)
    np.testing.assert_allclose(
        np.array(l1_ragged), np.array(jnp.mean(jnp.abs(xr - yr))), rtol=1e-5, atol=1e-5
    )

    # 128-divisible but non-tile-aligned shape exercises the zero-copy path,
    # the multi-tile split grid, partial edge-tile masking and tile clamping.
    xl = jax.random.normal(k8, (3, 5, 97, 128), dtype=jnp.float32)   # 1455 rows of 128
    yl = jax.random.normal(k9, (3, 5, 97, 128), dtype=jnp.float32)
    ref_l1 = jnp.mean(jnp.abs(xl - yl))
    for tgt in (2048, 128, 512):   # single full-extent block / even tiling / clamped tiling
        got = l1_loss(xl, yl, target_tile_rows=tgt, num_splits=2)
        jax.block_until_ready(got)
        np.testing.assert_allclose(np.array(got), np.array(ref_l1), rtol=1e-5, atol=1e-5)

    print("KERNEL_OK")
</pallas_src>

<mosaic_0001>
module attributes {stable_mosaic.version = 11 : i64} {
  func.func @_l1_sum_kernel(%arg0: i32, %arg1: i32, %arg2: memref<16x128xf32, #tpu.memory_space<vmem>>, %arg3: memref<16x128xf32, #tpu.memory_space<vmem>>, %arg4: memref<1x8x128xf32, #tpu.memory_space<vmem>>, %arg5: memref<16x128xf32, #tpu.memory_space<vmem>>) attributes {dimension_semantics = [#tpu.dimension_semantics<parallel>, #tpu.dimension_semantics<arbitrary>], iteration_bounds = array<i64: 1, 1>, scalar_prefetch = 0 : i64, scratch_operands = 1 : i64, tpu.core_type = #tpu.core_type<tc>, window_params = [{transform_indices = @transform_0, window_bounds = array<i64: 16, 128>}, {transform_indices = @transform_1, window_bounds = array<i64: 16, 128>}, {transform_indices = @transform_2, window_bounds = array<i64: 1, 8, 128>}]} {
    %c0_i32 = arith.constant 0 : i32
    %0 = arith.cmpi eq, %arg1, %c0_i32 : i32
    %1 = arith.extui %0 : i1 to i32
    %c0_i32_0 = arith.constant 0 : i32
    %2 = arith.cmpi ne, %1, %c0_i32_0 : i32
    scf.if %2 {
      %cst = arith.constant 0.000000e+00 : f32
      %13 = vector.broadcast %cst : f32 to vector<16x128xf32>
      %c0_10 = arith.constant 0 : index
      %c0_11 = arith.constant 0 : index
      %14 = vector.load %arg5[%c0_10, %c0_11] : memref<16x128xf32, #tpu.memory_space<vmem>>, vector<16x128xf32>
      tpu.vector_store %arg5[%c0_10, %c0_11], %13 {strides = array<i32>} : memref<16x128xf32, #tpu.memory_space<vmem>>, vector<16x128xf32>,
    } else {
    }
    %c0 = arith.constant 0 : index
    %c0_1 = arith.constant 0 : index
    %3 = vector.load %arg2[%c0, %c0_1] : memref<16x128xf32, #tpu.memory_space<vmem>>, vector<16x128xf32>
    %c0_2 = arith.constant 0 : index
    %c0_3 = arith.constant 0 : index
    %4 = vector.load %arg3[%c0_2, %c0_3] : memref<16x128xf32, #tpu.memory_space<vmem>>, vector<16x128xf32>
    %5 = arith.subf %3, %4 : vector<16x128xf32>
    %6 = math.absf %5 : vector<16x128xf32>
    %c0_4 = arith.constant 0 : index
    %c0_5 = arith.constant 0 : index
    %7 = vector.load %arg5[%c0_4, %c0_5] : memref<16x128xf32, #tpu.memory_space<vmem>>, vector<16x128xf32>
    %8 = arith.addf %7, %6 : vector<16x128xf32>
    %c0_6 = arith.constant 0 : index
    %c0_7 = arith.constant 0 : index
    %9 = vector.load %arg5[%c0_6, %c0_7] : memref<16x128xf32, #tpu.memory_space<vmem>>, vector<16x128xf32>
    tpu.vector_store %arg5[%c0_6, %c0_7], %8 {strides = array<i32>} : memref<16x128xf32, #tpu.memory_space<vmem>>, vector<16x128xf32>,
    %c0_i32_8 = arith.constant 0 : i32
    %10 = arith.cmpi eq, %arg1, %c0_i32_8 : i32
    %11 = arith.extui %10 : i1 to i32
    %c0_i32_9 = arith.constant 0 : i32
    %12 = arith.cmpi ne, %11, %c0_i32_9 : i32
    scf.if %12 {
      %c0_10 = arith.constant 0 : index
      %c0_11 = arith.constant 0 : index
      %13 = vector.load %arg5[%c0_10, %c0_11] : memref<16x128xf32, #tpu.memory_space<vmem>>, vector<16x128xf32>
      %14 = vector.shape_cast %13 : vector<16x128xf32> to vector<1x16x128xf32>
      %cst = arith.constant dense<0.000000e+00> : vector<1xf32>
      %15 = vector.multi_reduction <add>, %14, %cst [1, 2] : vector<1x16x128xf32> to vector<1xf32>
      %16 = vector.shape_cast %15 : vector<1xf32> to vector<1x1x1xf32>
      %17 = vector.extract %16[0, 0, 0] : f32 from vector<1x1x1xf32>
      %18 = vector.broadcast %17 : f32 to vector<1x8x128xf32>
      %c0_12 = arith.constant 0 : index
      %c0_13 = arith.constant 0 : index
      %c0_14 = arith.constant 0 : index
      %19 = vector.load %arg4[%c0_12, %c0_13, %c0_14] : memref<1x8x128xf32, #tpu.memory_space<vmem>>, vector<1x8x128xf32>
      tpu.vector_store %arg4[%c0_12, %c0_13, %c0_14], %18 {strides = array<i32>} : memref<1x8x128xf32, #tpu.memory_space<vmem>>, vector<1x8x128xf32>,
    } else {
    }
    return
  }
  func.func @transform_0(%arg0: i32, %arg1: i32) -> (i32, i32) {
    %c1_i32 = arith.constant 1 : i32
    %0 = arith.muli %arg0, %c1_i32 : i32
    %1 = arith.addi %0, %arg1 : i32
    %c0_i32 = arith.constant 0 : i32
    %c0_i32_0 = arith.constant 0 : i32
    return %1, %c0_i32 : i32, i32
  }
  func.func @transform_1(%arg0: i32, %arg1: i32) -> (i32, i32) {
    %c1_i32 = arith.constant 1 : i32
    %0 = arith.muli %arg0, %c1_i32 : i32
    %1 = arith.addi %0, %arg1 : i32
    %c0_i32 = arith.constant 0 : i32
    %c0_i32_0 = arith.constant 0 : i32
    return %1, %c0_i32 : i32, i32
  }
  func.func @transform_2(%arg0: i32, %arg1: i32) -> (i32, i32, i32) {
    %c0_i32 = arith.constant 0 : i32
    %c0_i32_0 = arith.constant 0 : i32
    %c0_i32_1 = arith.constant 0 : i32
    return %arg0, %c0_i32, %c0_i32_0 : i32, i32, i32
  }
}

</mosaic_0001>

<llo_original>
// kernel: tpu_custom_call.1
$region0: #{tpu_custom_call.1}
  #allocation0 [shape = 'u32[]', space=smem, size = 0x4, offset = 0x4, fixed_abs, tag = 'smem constant byte address 0x4 - core index']
  #allocation1 [shape = 'u32[72,128]{1,0:T(1,128)}', space=vmem, size = 0x9000, scoped, tag = 'internal scratch']
  #allocation2 [shape = 'f32[16,128]{1,0:T(8,128)}', space=vmem, size = 0x2000, scoped, tag = 'scratch operand']
  %s0 = inlined_call_operand.hbm [shape: f32[16,128], index: 0, kind: input, shape index: {}]
  %s1 = inlined_call_operand.hbm [shape: f32[16,128], index: 1, kind: input, shape index: {}]
  %s2 = inlined_call_operand.hbm [shape: f32[1,8,128], index: 2, kind: output, shape index: {}]
  %s3 = sld [smem:[#allocation0]]
  $region34: #{tpu_custom_call.1} parent=0
    _
  %s5 = ssub.s32 1, %s3
  %s6 = scalar_select 0, %s5, %s3
  $region1: #{tpu_custom_call.1} parent=0
    #allocation3 [shape = 'u8[8192]{0}', space=vmem, size = 0x2000, scoped, tag = 'input window, operand 0, single buffered']
    #allocation4 [shape = 's32[1]{0}', space=sflag, size = 0x4, scoped, tag = 'scoped memory for tpu_custom_call.1']
    #allocation5 [shape = 's32[1]{0}', space=sflag, size = 0x4, scoped, tag = 'scoped memory for tpu_custom_call.1']
    #allocation6 [shape = 'u8[8192]{0}', space=vmem, size = 0x2000, scoped, tag = 'input window, operand 1, single buffered']
    #allocation7 [shape = 's32[1]{0}', space=sflag, size = 0x4, scoped, tag = 'scoped memory for tpu_custom_call.1']
    #allocation8 [shape = 'u8[4096]{0}', space=vmem, size = 0x1000, scoped, tag = 'output window, operand 0, single buffered']
    %7 = vsyncpa [#allocation4], 0
    %8 = vsyncpa [#allocation7], 0
    %9 = vsyncpa [#allocation5], 0
    // Predicated region
    $region2: #{tpu_custom_call.1} parent=1 // pred_check
      _
    $region3: #{tpu_custom_call.1} parent=1 // pred_check_branch
      %11 = sbr.rel (0) target = $region5
    $region4: #{tpu_custom_call.1} parent=1 // pred_region
      %s12 = sadd.s32 0, 0
      %s13 = smul.u32 2, %s12
      %15 = vsyncadd [#allocation4], 0
      %s16 = smul.addr %s13, 8
      %s17 = scalar_lea.hbm %s0, %s16
      %s18 = sshll.u32 %s17, 4
      %s19 = int_to_ptr.hbm [resolvable:$true] %s18
      %s20 = sshll.u32 [#allocation3], 4
      %s21 = int_to_ptr.vmem [resolvable:$true] %s20
      %26 = dma.hbm_to_vmem [thread:$0]  %s19, 256, %s21, [#allocation4], 128, 128, 8
    $region5: #{tpu_custom_call.1} parent=1 // pred_fallthru
      _
    // Predicated region
    $region6: #{tpu_custom_call.1} parent=1 // pred_check
      _
    $region7: #{tpu_custom_call.1} parent=1 // pred_check_branch
      %28 = sbr.rel (0) target = $region9
    $region8: #{tpu_custom_call.1} parent=1 // pred_region
      %s29 = sadd.s32 0, 0
      %s30 = smul.u32 2, %s29
      %32 = vsyncadd [#allocation7], 0
      %s33 = smul.addr %s30, 8
      %s34 = scalar_lea.hbm %s1, %s33
      %s35 = sshll.u32 %s34, 4
      %s36 = int_to_ptr.hbm [resolvable:$true] %s35
      %s37 = sshll.u32 [#allocation6], 4
      %s38 = int_to_ptr.vmem [resolvable:$true] %s37
      %43 = dma.hbm_to_vmem [thread:$0]  %s36, 256, %s38, [#allocation7], 128, 128, 8
    $region9: #{tpu_custom_call.1} parent=1 // pred_fallthru
      _
    // Predicated region
    $region10: #{tpu_custom_call.1} parent=1 // pred_check
      _
    $region11: #{tpu_custom_call.1} parent=1 // pred_check_branch
      %45 = sbr.rel (0) target = $region13
    $region12: #{tpu_custom_call.1} parent=1 // pred_region
      %47 = dma.done [#allocation4], 256
    $region13: #{tpu_custom_call.1} parent=1 // pred_fallthru
      _
    // Predicated region
    $region14: #{tpu_custom_call.1} parent=1 // pred_check
      _
    $region15: #{tpu_custom_call.1} parent=1 // pred_check_branch
      %49 = sbr.rel (0) target = $region17
    $region16: #{tpu_custom_call.1} parent=1 // pred_region
      %51 = dma.done [#allocation7], 256
    $region17: #{tpu_custom_call.1} parent=1 // pred_fallthru
      _
    %s52 = sadd.s32 0, 0
    %s53 = smul.u32 2, %s52
    %s54 = sadd.s32 0, 0
    %s55 = smul.u32 2, %s54
    %p56 = scmp.eq.s32.totalorder 0, 0
    // Predicated region
    $region18: #{tpu_custom_call.1} parent=1 // pred_check
      %p57 = pneg %p56
    $region19: #{tpu_custom_call.1} parent=1 // pred_check_branch
      %59 = sbr.rel (%p57) target = $region21
    $region20: #{tpu_custom_call.1} parent=1 // pred_region
      %60 = vst [vmem:[#allocation2] sm:$0xff] 0.0
      %61 = vst [vmem:[#allocation2 + $0x8] sm:$0xff] 0.0
    $region21: #{tpu_custom_call.1} parent=1 // pred_fallthru
      _
    %v62 = vld [vmem:[#allocation3] sm:$0xff]
    %v63 = vld [vmem:[#allocation3 + $0x8] sm:$0xff]
    %v64 = vld [vmem:[#allocation6] sm:$0xff]
    %v65 = vld [vmem:[#allocation6 + $0x8] sm:$0xff]
    %v66 = vsub.f32 %v62, %v64
    %v67 = vsub.f32 %v63, %v65
    %v68 = vand.u32 2147483647, %v66
    %v69 = vand.u32 2147483647, %v67
    %v70 = vld [vmem:[#allocation2] sm:$0xff]
    %v71 = vld [vmem:[#allocation2 + $0x8] sm:$0xff]
    %v72 = vadd.f32 %v70, %v68
    %v73 = vadd.f32 %v71, %v69
    %74 = vst [vmem:[#allocation2] sm:$0xff] %v72
    %75 = vst [vmem:[#allocation2 + $0x8] sm:$0xff] %v73
    // Predicated region
    $region22: #{tpu_custom_call.1} parent=1 // pred_check
      %p76 = pneg %p56
    $region23: #{tpu_custom_call.1} parent=1 // pred_check_branch
      %78 = sbr.rel (%p76) target = $region25
    $region24: #{tpu_custom_call.1} parent=1 // pred_region
      %v79 = vld [vmem:[#allocation2] sm:$0xff]
      %v80 = vld [vmem:[#allocation2 + $0x8] sm:$0xff]
      %v81 = vadd.f32 %v79, %v80
      %82 = vadd.xlane.f32.xlu0 %v81
      %v83 = vpop.xlane.xlu0 %82
      %v84 = vrot.slane %v83, 4
      %v85 = vadd.f32 %v83, %v84
      %v86 = vrot.slane %v85, 2
      %v87 = vadd.f32 %v85, %v86
      %v88 = vrot.slane %v87, 1
      %v89 = vadd.f32 %v87, %v88
      %s90 = vtos %v89
      %v91 = vstv %s90
      %92 = vst [vmem:[#allocation8] sm:$0xff] %v91
    $region25: #{tpu_custom_call.1} parent=1 // pred_fallthru
      _
    // Predicated region
    $region26: #{tpu_custom_call.1} parent=1 // pred_check
      _
    $region27: #{tpu_custom_call.1} parent=1 // pred_check_branch
      %94 = sbr.rel (0) target = $region29
    $region28: #{tpu_custom_call.1} parent=1 // pred_region
      %96 = vsyncadd [#allocation5], 0
      %s98 = sshll.u32 [#allocation8], 4
      %s99 = int_to_ptr.vmem [resolvable:$true] %s98
      %s100 = sshll.u32 %s2, 4
      %s101 = int_to_ptr.hbm [resolvable:$true] %s100
      %103 = dma.vmem_to_hbm [thread:$0]  %s99, 128, %s101, [#allocation5]
    $region29: #{tpu_custom_call.1} parent=1 // pred_fallthru
      _
    // Predicated region
    $region30: #{tpu_custom_call.1} parent=1 // pred_check
      _
    $region31: #{tpu_custom_call.1} parent=1 // pred_check_branch
      %105 = sbr.rel (0) target = $region33
    $region32: #{tpu_custom_call.1} parent=1 // pred_region
      %107 = dma.done [#allocation5], 128
    $region33: #{tpu_custom_call.1} parent=1 // pred_fallthru
      _
    %108 = vsyncpa [#allocation4], 1
    %109 = vsyncpa [#allocation7], 1
    %110 = vsyncpa [#allocation5], 1

</llo_original>
